<compile_context>
chip_gen: v7x
topology: tpu7x:2x2x1
jax: 0.10.0
libtpu: 0.0.40
codegen_flags: <defaults>
</compile_context>

<pallas_src>
import functools

import jax
import jax.numpy as jnp
from jax import lax
from jax.experimental import pallas as pl
from jax.experimental.pallas import tpu as pltpu


# ---------------------------------------------------------------------------
# Helpers / tuning constants
# ---------------------------------------------------------------------------

_VMEM_TABLE_BYTES_MAX = 4 * 1024 * 1024    # fast-path: table must fit in VMEM
_VMEM_ONEHOT_NODES_MAX = 1024              # fast-path: keep one-hot matmul cheap
_OUT_BLOCK_BYTES_MAX = 4 * 1024 * 1024     # slow-path: <=8 MiB double-buffered out block
_MAX_IDS_PER_CALL = 32768                  # slow-path: SMEM scalar-prefetch guard
_VMEM_LIMIT_BYTES = 32 * 1024 * 1024       # safe on v5e (16 GiB HBM/128 MiB VMEM),
                                           # v6e (128 MiB) and v7x (64 MiB/TC)


def _sublane_multiple(dtype) -> int:
    """Minimum second-to-last block dim for full-sublane tiles (dtype-aware)."""
    return max(8, 32 // jnp.dtype(dtype).itemsize)   # f32: 8, bf16: 16, int8/fp8: 32


def _round_up(x: int, m: int) -> int:
    return ((x + m - 1) // m) * m


# ---------------------------------------------------------------------------
# Fast path: table resident in VMEM, gather = one-hot @ table on the MXU
# ---------------------------------------------------------------------------

def _onehot_gather_kernel(ids_ref, tbl_ref, out_ref):
    """ids_ref: VMEM (B, 1) int32; tbl_ref: VMEM (n_nodes, n_dim); out_ref: (B, n_dim)."""
    ids = ids_ref[...]                                              # (B, 1)
    node_iota = lax.broadcasted_iota(
        jnp.int32, (ids.shape[0], tbl_ref.shape[0]), 1)             # (B, n_nodes)
    onehot = (ids == node_iota).astype(tbl_ref.dtype)               # exact 0/1
    out_ref[...] = jnp.dot(
        onehot, tbl_ref[...], preferred_element_type=jnp.float32
    ).astype(out_ref.dtype)


def _lookup_vmem(flat_ids: jax.Array, table: jax.Array, ids_block: int) -> jax.Array:
    n = flat_ids.shape[0]
    n_nodes, n_dim = table.shape
    n_pad = _round_up(max(n, ids_block), ids_block)
    ids2d = jnp.pad(flat_ids, (0, n_pad - n)).reshape(n_pad, 1)

    out = pl.pallas_call(
        _onehot_gather_kernel,
        out_shape=jax.ShapeDtypeStruct((n_pad, n_dim), table.dtype),
        grid=(n_pad // ids_block,),
        in_specs=[
            pl.BlockSpec((ids_block, 1), lambda i: (i, 0)),
            # Constant index_map => table DMA'd to VMEM once and kept resident.
            pl.BlockSpec((n_nodes, n_dim), lambda i: (0, 0)),
        ],
        out_specs=pl.BlockSpec((ids_block, n_dim), lambda i: (i, 0)),
        compiler_params=pltpu.CompilerParams(
            dimension_semantics=("parallel",),          # megacore split on v7x
            vmem_limit_bytes=_VMEM_LIMIT_BYTES,
        ),
    )(ids2d, table)
    return out[:n]


# ---------------------------------------------------------------------------
# Large-table path: ids in SMEM (scalar prefetch), table in HBM,
# rows DMA'd directly into the pipelined output block.
# ---------------------------------------------------------------------------

def _dma_gather_kernel(ids_ref, tbl_hbm, out_ref, sem, *, rows_per_step: int,
                       unroll: int):
    """ids_ref: SMEM (n_pad,) int32; tbl_hbm: HBM (n_nodes, n_dim);
    out_ref: VMEM (rows_per_step, n_dim); sem: single shared DMA semaphore."""
    base = pl.program_id(0) * rows_per_step

    def _start(r):
        row = ids_ref[base + r]
        # Gather straight into the output block: no scratch, no VMEM->VMEM copy.
        pltpu.make_async_copy(tbl_hbm.at[row], out_ref.at[r], sem).start()

    def _wait(r):
        # All row copies have identical byte counts against the shared sem, so
        # one wait per issued copy drains it exactly (src index is irrelevant).
        pltpu.make_async_copy(tbl_hbm.at[0], out_ref.at[r], sem).wait()

    if rows_per_step <= 32:
        # Small blocks: full static unroll (all SMEM scalar reads before any wait).
        for r in range(rows_per_step):
            _start(r)
        for r in range(rows_per_step):
            _wait(r)
    else:
        def _start_body(r, carry):
            _start(r)
            return carry

        def _wait_body(r, carry):
            _wait(r)
            return carry

        lax.fori_loop(0, rows_per_step, _start_body, 0, unroll=unroll)
        lax.fori_loop(0, rows_per_step, _wait_body, 0, unroll=unroll)


def _lookup_hbm(flat_ids: jax.Array, table: jax.Array, rows_per_step: int,
                unroll: int = 8) -> jax.Array:
    n = flat_ids.shape[0]
    n_nodes, n_dim = table.shape
    n_pad = _round_up(max(n, rows_per_step), rows_per_step)
    ids = jnp.pad(flat_ids, (0, n_pad - n))          # padded slots gather row 0

    kernel = functools.partial(
        _dma_gather_kernel, rows_per_step=rows_per_step, unroll=unroll)

    out = pl.pallas_call(
        kernel,
        out_shape=jax.ShapeDtypeStruct((n_pad, n_dim), table.dtype),
        grid_spec=pltpu.PrefetchScalarGridSpec(
            num_scalar_prefetch=1,                             # flat ids -> SMEM
            grid=(n_pad // rows_per_step,),
            in_specs=[pl.BlockSpec(memory_space=pl.ANY)],      # table stays in HBM
            out_specs=pl.BlockSpec((rows_per_step, n_dim),
                                   lambda i, ids_sref: (i, 0)),
            scratch_shapes=[pltpu.SemaphoreType.DMA],          # one shared DMA sem
        ),
        compiler_params=pltpu.CompilerParams(
            dimension_semantics=("parallel",),                 # megacore split on v7x
            vmem_limit_bytes=_VMEM_LIMIT_BYTES,
        ),
    )(ids, table)
    return out[:n]


# ---------------------------------------------------------------------------
# Public wrapper (dispatch + padding + reshape)
# ---------------------------------------------------------------------------

def embedding_lookup(node_ids: jax.Array, table: jax.Array, *,
                     rows_per_step: int = 256, path: str = "auto") -> jax.Array:
    """Pallas equivalent of nn.Embedding forward: table[node_ids].

    node_ids: integer array of any shape; table: (n_nodes, n_dim).
    path: "auto" | "vmem" (one-hot MXU fast path) | "hbm" (DMA row gather).
    Returns node_ids.shape + (n_dim,) with table's dtype.
    """
    n_nodes, n_dim = table.shape
    itemsize = jnp.dtype(table.dtype).itemsize
    sub = _sublane_multiple(table.dtype)

    orig_shape = node_ids.shape
    flat_ids = node_ids.reshape(-1).astype(jnp.int32)
    n = flat_ids.shape[0]

    table_bytes = n_nodes * n_dim * itemsize
    use_vmem = (path == "vmem") or (
        path == "auto"
        and n_nodes <= _VMEM_ONEHOT_NODES_MAX
        and table_bytes <= _VMEM_TABLE_BYTES_MAX)

    if use_vmem:
        ids_block = max(sub, min(512, _round_up(n, sub)))
        out = _lookup_vmem(flat_ids, table, ids_block)
    else:
        # Dtype-aware sublane multiple + VMEM-budgeted output block.
        rps = max(sub, _round_up(rows_per_step, sub))
        budget_rows = max(sub, (_OUT_BLOCK_BYTES_MAX // (n_dim * itemsize)) // sub * sub)
        rps = min(rps, budget_rows)
        rps = max(sub, min(rps, _round_up(n, sub)))     # don't over-pad tiny inputs

        # SMEM guard: chunk scalar-prefetched ids across calls if too many.
        max_ids = max(rps, (_MAX_IDS_PER_CALL // rps) * rps)
        if n <= max_ids:
            out = _lookup_hbm(flat_ids, table, rps)
        else:
            chunks = [_lookup_hbm(flat_ids[s:s + max_ids], table, rps)
                      for s in range(0, n, max_ids)]
            out = jnp.concatenate(chunks, axis=0)

    return out.reshape(orig_shape + (n_dim,))


def _reference(node_ids: jax.Array, table: jax.Array) -> jax.Array:
    return jnp.take(table, node_ids, axis=0)


if __name__ == "__main__":
    key = jax.random.PRNGKey(0)

    # Module hyperparameters (small; n_dimensions is lane-dense: % 128 == 0).
    n_nodes = 64
    n_dimensions = 128
    batch, seq = 2, 8                      # node_ids shape (2, 8)

    k_tbl, k_ids = jax.random.split(key)
    table = jax.random.normal(k_tbl, (n_nodes, n_dimensions), dtype=jnp.float32)
    node_ids = jax.random.randint(k_ids, (batch, seq), 0, n_nodes, dtype=jnp.int32)

    ref = _reference(node_ids, table)

    # Auto dispatch -> small-table VMEM / one-hot MXU fast path.
    out_fast = jax.block_until_ready(embedding_lookup(node_ids, table))
    assert out_fast.shape == (batch, seq, n_dimensions), out_fast.shape
    assert out_fast.dtype == table.dtype, out_fast.dtype
    assert jnp.allclose(out_fast, ref), "fast (VMEM/MXU) path mismatch vs reference"

    # Also exercise the large-table path (HBM row gather, direct-to-out DMAs).
    out_dma = jax.block_until_ready(embedding_lookup(node_ids, table, path="hbm"))
    assert out_dma.shape == (batch, seq, n_dimensions), out_dma.shape
    assert jnp.array_equal(out_dma, ref), "HBM DMA-gather path mismatch vs reference"

    # NOTE: positional_embedding / pos_ids exist in the module but are unused
    # by forward(), so they are intentionally not implemented.
    print("KERNEL_OK")
</pallas_src>

<mosaic_0001>
module attributes {stable_mosaic.version = 11 : i64} {
  func.func @_onehot_gather_kernel(%arg0: i32, %arg1: memref<16x1xi32, #tpu.memory_space<vmem>>, %arg2: memref<64x128xf32, #tpu.memory_space<vmem>>, %arg3: memref<16x128xf32, #tpu.memory_space<vmem>>) attributes {dimension_semantics = [#tpu.dimension_semantics<parallel>], iteration_bounds = array<i64: 1>, scalar_prefetch = 0 : i64, scratch_operands = 0 : i64, tpu.core_type = #tpu.core_type<tc>, window_params = [{transform_indices = @transform_0, window_bounds = array<i64: 16, 1>}, {pipeline_mode = #tpu.pipeline_mode<synchronous>, transform_indices = @transform_1, window_bounds = array<i64: 64, 128>}, {transform_indices = @transform_2, window_bounds = array<i64: 16, 128>}]} {
    %c0 = arith.constant 0 : index
    %c0_0 = arith.constant 0 : index
    %0 = vector.load %arg1[%c0, %c0_0] : memref<16x1xi32, #tpu.memory_space<vmem>>, vector<16x1xi32>
    %1 = tpu.iota {dimensions = array<i32: 1>} : vector<16x64xi32>
    %2 = vector.broadcast %0 : vector<16x1xi32> to vector<16x64xi32>
    %3 = arith.cmpi eq, %2, %1 : vector<16x64xi32>
    %4 = arith.extui %3 : vector<16x64xi1> to vector<16x64xi32>
    %5 = arith.sitofp %4 : vector<16x64xi32> to vector<16x64xf32>
    %c0_1 = arith.constant 0 : index
    %c0_2 = arith.constant 0 : index
    %6 = vector.load %arg2[%c0_1, %c0_2] : memref<64x128xf32, #tpu.memory_space<vmem>>, vector<64x128xf32>
    %cst = arith.constant dense<0.000000e+00> : vector<16x128xf32>
    %7 = tpu.matmul %5, %6, %cst {dimension_numbers = #tpu.dot_dimension_numbers<[1], [0], [0], [1], [0, 0, 1, 1], [], []>} : vector<16x64xf32>, vector<64x128xf32>, vector<16x128xf32> -> vector<16x128xf32>
    %c0_3 = arith.constant 0 : index
    %c0_4 = arith.constant 0 : index
    %8 = vector.load %arg3[%c0_3, %c0_4] : memref<16x128xf32, #tpu.memory_space<vmem>>, vector<16x128xf32>
    tpu.vector_store %arg3[%c0_3, %c0_4], %7 {strides = array<i32>} : memref<16x128xf32, #tpu.memory_space<vmem>>, vector<16x128xf32>,
    return
  }
  func.func @transform_0(%arg0: i32) -> (i32, i32) {
    %c0_i32 = arith.constant 0 : i32
    %c0_i32_0 = arith.constant 0 : i32
    return %arg0, %c0_i32 : i32, i32
  }
  func.func @transform_1(%arg0: i32) -> (i32, i32) {
    %c0_i32 = arith.constant 0 : i32
    %c0_i32_0 = arith.constant 0 : i32
    %c0_i32_1 = arith.constant 0 : i32
    return %c0_i32, %c0_i32_0 : i32, i32
  }
  func.func @transform_2(%arg0: i32) -> (i32, i32) {
    %c0_i32 = arith.constant 0 : i32
    %c0_i32_0 = arith.constant 0 : i32
    return %arg0, %c0_i32 : i32, i32
  }
}

</mosaic_0001>

<llo_original>
// kernel: tpu_custom_call.1
$region0: #{tpu_custom_call.1}
  #allocation0 [shape = 'u32[]', space=smem, size = 0x4, offset = 0x4, fixed_abs, tag = 'smem constant byte address 0x4 - core index']
  #allocation1 [shape = 'u32[144,128]{1,0:T(1,128)}', space=vmem, size = 0x12000, scoped, tag = 'internal scratch']
  %s0 = inlined_call_operand.vmem [shape: s32[16,1], index: 0, kind: input, shape index: {}]
  %s1 = inlined_call_operand.hbm [shape: f32[64,128], index: 1, kind: input, shape index: {}]
  %s2 = inlined_call_operand.hbm [shape: f32[16,128], index: 2, kind: output, shape index: {}]
  %s3 = sld [smem:[#allocation0]]
  $region22: #{tpu_custom_call.1} parent=0
    _
  %s5 = ssub.s32 1, %s3
  %s6 = scalar_select 0, %s5, %s3
  $region1: #{tpu_custom_call.1} parent=0
    #allocation2 [shape = 'u8[32768]{0}', space=vmem, size = 0x8000, scoped, tag = 'input window, operand 1, single buffered']
    #allocation3 [shape = 's32[1]{0}', space=sflag, size = 0x4, scoped, tag = 'scoped memory for tpu_custom_call.1']
    #allocation4 [shape = 's32[1]{0}', space=sflag, size = 0x4, scoped, tag = 'scoped memory for tpu_custom_call.1']
    #allocation5 [shape = 'u8[8192]{0}', space=vmem, size = 0x2000, scoped, tag = 'output window, operand 0, single buffered']
    %7 = vsyncpa [#allocation3], 0
    %8 = vsyncpa [#allocation4], 0
    // Predicated region
    $region2: #{tpu_custom_call.1} parent=1 // pred_check
      _
    $region3: #{tpu_custom_call.1} parent=1 // pred_check_branch
      %10 = sbr.rel (0) target = $region5
    $region4: #{tpu_custom_call.1} parent=1 // pred_region
      _
    $region5: #{tpu_custom_call.1} parent=1 // pred_fallthru
      _
    // Predicated region
    $region6: #{tpu_custom_call.1} parent=1 // pred_check
      _
    $region7: #{tpu_custom_call.1} parent=1 // pred_check_branch
      %12 = sbr.rel (0) target = $region9
    $region8: #{tpu_custom_call.1} parent=1 // pred_region
      %s14 = ssub.s32 1024, 1024
      %15 = vsyncadd [#allocation3], %s14
      %s16 = sshll.u32 [#allocation2], 4
      %s17 = int_to_ptr.vmem [resolvable:$true] %s16
      %22 = dma.hbm_to_vmem [thread:$0]  %s1, 1024, %s17, [#allocation3], 128, 128, 8
    $region9: #{tpu_custom_call.1} parent=1 // pred_fallthru
      _
    // Predicated region
    $region10: #{tpu_custom_call.1} parent=1 // pred_check
      _
    $region11: #{tpu_custom_call.1} parent=1 // pred_check_branch
      %24 = sbr.rel (0) target = $region13
    $region12: #{tpu_custom_call.1} parent=1 // pred_region
      %25 = dma.done [#allocation3], 1024
    $region13: #{tpu_custom_call.1} parent=1 // pred_fallthru
      _
    %v26 = vld [vmem:[%s0] sm:$0xff]
    %v27 = vld [vmem:[%s0 + $0x8] sm:$0xff]
    %v28 = vlaneseq
    %v29 = vand.u32 %v28, 127
    %30 = vset.pattern.permute.xlu0 0
    %31 = vperm.xlu0 %30, %v26
    %v32 = vpop.permute.xlu0 %31
    %33 = vset.pattern.permute.xlu0 0
    %34 = vperm.xlu0 %33, %v27
    %v35 = vpop.permute.xlu0 %34
    %vm36 = vcmp.eq.s32.totalorder %v32, %v29
    %vm37 = vcmp.eq.s32.totalorder %v35, %v29
    %v38 = vsel %vm36, 1, 0
    %v39 = vsel %vm37, 1, 0
    %v40 = vcvt.s32.f32 %v38
    %v41 = vcvt.s32.f32 %v39
    %v42 = vld [vmem:[#allocation2] sm:$0xff]
    %v43 = vld [vmem:[#allocation2 + $0x8] sm:$0xff]
    %v44 = vld [vmem:[#allocation2 + $0x10] sm:$0xff]
    %v45 = vld [vmem:[#allocation2 + $0x18] sm:$0xff]
    %v46 = vld [vmem:[#allocation2 + $0x20] sm:$0xff]
    %v47 = vld [vmem:[#allocation2 + $0x28] sm:$0xff]
    %v48 = vld [vmem:[#allocation2 + $0x30] sm:$0xff]
    %v49 = vld [vmem:[#allocation2 + $0x38] sm:$0xff]
    %vm50 = vcmask 523264
    %v52 = vsel %vm50, %v40, 0
    %v55 = vsel %vm50, %v41, 0
    %57 = vmatprep.subr.mxu0 0.0
    %58 = vmatpush1.msra.mxu0 %v42
    %59 = vmatprep.subr.mxu0 0.0
    %60 = vmatpush1.msra.mxu0 %v43
    %61 = vmatprep.subr.mxu0 0.0
    %62 = vmatpush1.msra.mxu0 %v44
    %63 = vmatprep.subr.mxu0 0.0
    %64 = vmatpush1.msra.mxu0 %v45
    %65 = vmatprep.subr.mxu0 0.0
    %66 = vmatpush1.msra.mxu0 %v46
    %67 = vmatprep.subr.mxu0 0.0
    %68 = vmatpush1.msra.mxu0 %v47
    %69 = vmatprep.subr.mxu0 0.0
    %70 = vmatpush1.msra.mxu0 %v48
    %71 = vmatprep.subr.mxu0 0.0
    %72 = vmatpush1.msra.mxu0 %v49
    %73 = vmatprep.subr.mxu0 0.0
    %74 = vmatpush1.msra.mxu0 0.0
    %75 = vmatprep.subr.mxu0 0.0
    %76 = vmatpush1.msra.mxu0 0.0
    %77 = vmatprep.subr.mxu0 0.0
    %78 = vmatpush1.msra.mxu0 0.0
    %79 = vmatprep.subr.mxu0 0.0
    %80 = vmatpush1.msra.mxu0 0.0
    %81 = vmatprep.subr.mxu0 0.0
    %82 = vmatpush1.msra.mxu0 0.0
    %83 = vmatprep.subr.mxu0 0.0
    %84 = vmatpush1.msra.mxu0 0.0
    %85 = vmatprep.subr.mxu0 0.0
    %86 = vmatpush1.msra.mxu0 0.0
    %87 = vmatprep.subr.mxu0 0.0
    %88 = vmatpush1.msra.mxu0 0.0
    %89 = vmatprep.subr.mxu0 0.0
    %90 = vmatpush1.msra.mxu0 0.0
    %91 = vmatprep.subr.mxu0 0.0
    %92 = vmatpush1.msra.mxu0 0.0
    %93 = vmatprep.subr.mxu0 0.0
    %94 = vmatpush1.msra.mxu0 0.0
    %95 = vmatprep.subr.mxu0 0.0
    %96 = vmatpush1.msra.mxu0 0.0
    %97 = vmatprep.subr.mxu0 0.0
    %98 = vmatpush1.msra.mxu0 0.0
    %99 = vmatprep.subr.mxu0 0.0
    %100 = vmatpush1.msra.mxu0 0.0
    %101 = vmatprep.subr.mxu0 0.0
    %102 = vmatpush1.msra.mxu0 0.0
    %103 = vmatprep.subr.mxu0 0.0
    %104 = vmatpush1.msra.mxu0 0.0
    %105 = vmatprep.subr.mxu0 0.0
    %106 = vmatpush1.msra.mxu0 0.0
    %107 = vmatprep.subr.mxu0 0.0
    %108 = vmatpush1.msra.mxu0 0.0
    %109 = vmatprep.subr.mxu0 0.0
    %110 = vmatpush1.msra.mxu0 0.0
    %111 = vmatprep.subr.mxu0 0.0
    %112 = vmatpush1.msra.mxu0 0.0
    %113 = vmatprep.subr.mxu0 0.0
    %114 = vmatpush1.msra.mxu0 0.0
    %115 = vmatprep.subr.mxu0 0.0
    %116 = vmatpush1.msra.mxu0 0.0
    %117 = vmatprep.subr.mxu0 0.0
    %118 = vmatpush1.msra.mxu0 0.0
    %119 = vmatprep.subr.mxu0 0.0
    %120 = vmatpush1.msra.mxu0 0.0
    %121 = vmatprep.mubr.f32.mxu0 0.0
    %122 = vmatmul.mubr.f32.gmra.mrb[0].mxu0 %v52
    %v123 = vpop.f32.mrb[0].mxu0
    %v124 = vadd.f32 0.0, %v123
    %v125 = vpop.f32.mrb[0].mxu0
    %126 = vmatprep.mubr.f32.mxu0 0.0
    %127 = vmatmul.mubr.f32.gmra.mrb[0].mxu0 %v55
    %v128 = vpop.f32.mrb[0].mxu0
    %v129 = vadd.f32 0.0, %v128
    %v130 = vpop.f32.mrb[0].mxu0
    %131 = vdwg.mxu0
    %132 = vst [vmem:[#allocation5] sm:$0xff] %v124
    %133 = vst [vmem:[#allocation5 + $0x8] sm:$0xff] %v129
    // Predicated region
    $region14: #{tpu_custom_call.1} parent=1 // pred_check
      _
    $region15: #{tpu_custom_call.1} parent=1 // pred_check_branch
      %135 = sbr.rel (0) target = $region17
    $region16: #{tpu_custom_call.1} parent=1 // pred_region
      %s137 = ssub.s32 256, 256
      %138 = vsyncadd [#allocation4], %s137
      %s139 = sshll.u32 [#allocation5], 4
      %s140 = int_to_ptr.vmem [resolvable:$true] %s139
      %145 = dma.vmem_to_hbm [thread:$0]  %s140, 256, %s2, [#allocation4], 128, 128, 8
    $region17: #{tpu_custom_call.1} parent=1 // pred_fallthru
      _
    // Predicated region
    $region18: #{tpu_custom_call.1} parent=1 // pred_check
      _
    $region19: #{tpu_custom_call.1} parent=1 // pred_check_branch
      %147 = sbr.rel (0) target = $region21
    $region20: #{tpu_custom_call.1} parent=1 // pred_region
      %148 = dma.done [#allocation4], 256
    $region21: #{tpu_custom_call.1} parent=1 // pred_fallthru
      _
    %149 = vsyncpa [#allocation3], 1
    %150 = vsyncpa [#allocation4], 1

</llo_original>
